<compile_context>
chip_gen: v6e
topology: v6e:2x2x1
jax: 0.10.0
libtpu: 0.0.40
codegen_flags: <defaults>
</compile_context>

<pallas_src>
import functools

import jax
import jax.numpy as jnp
from jax.experimental import pallas as pl
from jax.experimental.pallas import tpu as pltpu

# Default PyTorch SELU constants (match the reference nn.Module).
_ALPHA = 1.6732632423543772
_SCALE = 1.0507009873554805

# Lane-dense block width (multiple of 128 -> unmasked vst, full vregs).
_LANE_W = 512
# Rows per grid tile: (1024, 512) f32 tile = 2 MiB; double-buffered in + out
# = 8 MiB, comfortably inside the 32 MiB scoped VMEM default on v5e/v6e/v7x.
_TM = 1024


def _selu_kernel(x_ref, o_ref, *, alpha, scale):
    # Elementwise SELU on one (tm, _LANE_W) tile.
    # Compute in f32: exp goes to the EUP, select/mul to the VPU. We keep
    # elementwise math in f32 (v5e VPU/EUP have no bf16 path).
    x = x_ref[...].astype(jnp.float32)
    # Clamp the exp argument so the discarded branch never overflows.
    neg = alpha * (jnp.exp(jnp.minimum(x, 0.0)) - 1.0)
    y = scale * jnp.where(x > 0.0, x, neg)
    o_ref[...] = y.astype(o_ref.dtype)


def selu(x, alpha=_ALPHA, scale=_SCALE):
    """Forward of SELU(alpha, scale, inplace=False): scale * ELU(x, alpha)."""
    orig_shape = x.shape
    dtype = x.dtype

    # Flatten to 1D and fold into a lane-dense (rows, 512) slab so every store
    # is a full, unmasked vector store regardless of the input's trailing dim.
    flat = x.reshape(-1)
    n = flat.shape[0]

    rows = pl.cdiv(n, _LANE_W)
    if rows <= _TM:
        # Small problem: one grid step, block == full array (always legal).
        tm = int(rows)
    else:
        # Large problem: round rows up so _TM-row tiles divide evenly, then
        # pipeline over the row-tile grid with double buffering.
        rows = pl.cdiv(rows, _TM) * _TM
        tm = _TM
    rows = int(rows)
    padded = rows * _LANE_W
    if padded != n:
        flat = jnp.pad(flat, (0, padded - n))
    x2d = flat.reshape(rows, _LANE_W)

    grid = (rows // tm,)
    kernel = functools.partial(_selu_kernel, alpha=alpha, scale=scale)

    y2d = pl.pallas_call(
        kernel,
        out_shape=jax.ShapeDtypeStruct((rows, _LANE_W), dtype),
        grid=grid,
        in_specs=[pl.BlockSpec((tm, _LANE_W), lambda i: (i, 0))],
        out_specs=pl.BlockSpec((tm, _LANE_W), lambda i: (i, 0)),
        compiler_params=pltpu.CompilerParams(
            # Independent row tiles: lets v7x's two TensorCores split the grid.
            dimension_semantics=("parallel",),
        ),
    )(x2d)

    # Strip padding and restore the original shape.
    return y2d.reshape(-1)[:n].reshape(orig_shape)


if __name__ == "__main__":
    # Small image-model-like activation tensor: (batch, channels, H, W).
    B, C, H, W = 2, 4, 16, 16

    key = jax.random.PRNGKey(0)
    x = jax.random.normal(key, (B, C, H, W), dtype=jnp.float32)

    y = jax.block_until_ready(selu(x))

    # Pure-JAX reference: scale * ELU(x, alpha).
    ref = _SCALE * jnp.where(x > 0, x, _ALPHA * jnp.expm1(x))

    assert y.shape == x.shape, (y.shape, x.shape)
    assert jnp.allclose(y, ref, atol=1e-5, rtol=1e-5), "mismatch vs reference"

    print("KERNEL_OK")
</pallas_src>

<mosaic_0001>
module attributes {stable_mosaic.version = 11 : i64} {
  func.func @_selu_kernel(%arg0: i32, %arg1: memref<4x512xf32, #tpu.memory_space<vmem>>, %arg2: memref<4x512xf32, #tpu.memory_space<vmem>>) attributes {dimension_semantics = [#tpu.dimension_semantics<parallel>], iteration_bounds = array<i64: 1>, scalar_prefetch = 0 : i64, scratch_operands = 0 : i64, tpu.core_type = #tpu.core_type<tc>, window_params = [{transform_indices = @transform_0, window_bounds = array<i64: 4, 512>}, {transform_indices = @transform_1, window_bounds = array<i64: 4, 512>}]} {
    %c0 = arith.constant 0 : index
    %c0_0 = arith.constant 0 : index
    %0 = vector.load %arg1[%c0, %c0_0] : memref<4x512xf32, #tpu.memory_space<vmem>>, vector<4x512xf32>
    %cst = arith.constant 0.000000e+00 : f32
    %1 = vector.broadcast %cst : f32 to vector<4x512xf32>
    %2 = arith.minimumf %0, %1 : vector<4x512xf32>
    %3 = math.exp %2 : vector<4x512xf32>
    %cst_1 = arith.constant 1.000000e+00 : f32
    %4 = vector.broadcast %cst_1 : f32 to vector<4x512xf32>
    %5 = arith.subf %3, %4 : vector<4x512xf32>
    %cst_2 = arith.constant 1.67326319 : f32
    %6 = vector.broadcast %cst_2 : f32 to vector<4x512xf32>
    %7 = arith.mulf %6, %5 : vector<4x512xf32>
    %cst_3 = arith.constant 0.000000e+00 : f32
    %8 = vector.broadcast %cst_3 : f32 to vector<4x512xf32>
    %9 = arith.cmpf ogt, %0, %8 : vector<4x512xf32>
    %10 = arith.select %9, %0, %7 : vector<4x512xi1>, vector<4x512xf32>
    %cst_4 = arith.constant 1.05070102 : f32
    %11 = vector.broadcast %cst_4 : f32 to vector<4x512xf32>
    %12 = arith.mulf %11, %10 : vector<4x512xf32>
    %c0_5 = arith.constant 0 : index
    %c0_6 = arith.constant 0 : index
    %13 = vector.load %arg2[%c0_5, %c0_6] : memref<4x512xf32, #tpu.memory_space<vmem>>, vector<4x512xf32>
    tpu.vector_store %arg2[%c0_5, %c0_6], %12 {strides = array<i32>} : memref<4x512xf32, #tpu.memory_space<vmem>>, vector<4x512xf32>,
    return
  }
  func.func @transform_0(%arg0: i32) -> (i32, i32) {
    %c0_i32 = arith.constant 0 : i32
    %c0_i32_0 = arith.constant 0 : i32
    return %arg0, %c0_i32 : i32, i32
  }
  func.func @transform_1(%arg0: i32) -> (i32, i32) {
    %c0_i32 = arith.constant 0 : i32
    %c0_i32_0 = arith.constant 0 : i32
    return %arg0, %c0_i32 : i32, i32
  }
}

</mosaic_0001>

<llo_original>
// kernel: tpu_custom_call.1
$region0: #{tpu_custom_call.1}
  #allocation0 [shape = 'u32[]', space=smem, size = 0x4, offset = 0x4, fixed_abs, tag = 'smem constant byte address 0x4 - core index']
  #allocation1 [shape = 'u32[144,128]{1,0:T(1,128)}', space=vmem, size = 0x12000, scoped, tag = 'internal scratch']
  %s0 = inlined_call_operand.hbm [shape: f32[4,512], index: 0, kind: input, shape index: {}]
  %s1 = inlined_call_operand.hbm [shape: f32[4,512], index: 1, kind: output, shape index: {}]
  %s2 = sld [smem:[#allocation0]]
  $region18: #{tpu_custom_call.1} parent=0
    _
  %s4 = ssub.s32 1, %s2
  %s5 = scalar_select 0, %s4, %s2
  $region1: #{tpu_custom_call.1} parent=0
    #allocation2 [shape = 'u8[8192]{0}', space=vmem, size = 0x2000, scoped, tag = 'input window, operand 0, single buffered']
    #allocation3 [shape = 's32[1]{0}', space=sflag, size = 0x4, scoped, tag = 'scoped memory for tpu_custom_call.1']
    #allocation4 [shape = 's32[1]{0}', space=sflag, size = 0x4, scoped, tag = 'scoped memory for tpu_custom_call.1']
    #allocation5 [shape = 'u8[8192]{0}', space=vmem, size = 0x2000, scoped, tag = 'output window, operand 0, single buffered']
    %6 = vsyncpa [#allocation3], 0
    %7 = vsyncpa [#allocation4], 0
    // Predicated region
    $region2: #{tpu_custom_call.1} parent=1 // pred_check
      _
    $region3: #{tpu_custom_call.1} parent=1 // pred_check_branch
      %9 = sbr.rel (0) target = $region5
    $region4: #{tpu_custom_call.1} parent=1 // pred_region
      %s11 = ssub.s32 256, 256
      %12 = vsyncadd [#allocation3], %s11
      %s14 = sshll.u32 [#allocation2], 4
      %s15 = int_to_ptr.vmem [resolvable:$true] %s14
      %17 = dma.hbm_to_vmem [thread:$0]  %s0, 256, %s15, [#allocation3]
    $region5: #{tpu_custom_call.1} parent=1 // pred_fallthru
      _
    // Predicated region
    $region6: #{tpu_custom_call.1} parent=1 // pred_check
      _
    $region7: #{tpu_custom_call.1} parent=1 // pred_check_branch
      %19 = sbr.rel (0) target = $region9
    $region8: #{tpu_custom_call.1} parent=1 // pred_region
      %20 = dma.done [#allocation3], 256
    $region9: #{tpu_custom_call.1} parent=1 // pred_fallthru
      _
    %v21 = vld [vmem:[#allocation2] sm:$0xff]
    %v22 = vld [vmem:[#allocation2 + $0x8] sm:$0xff]
    %v23 = vmin.f32 %v21, 0.0
    %v24 = vmin.f32 %v22, 0.0
    %v25 = vmul.f32 %v23, 1.442695
    %v26 = vpow.pop %v25
    %v27 = vmul.f32 %v24, 1.442695
    %v28 = vpow.pop %v27
    %v29 = vsub.f32 %v26, 1.0
    %v30 = vsub.f32 %v28, 1.0
    %v31 = vmul.f32 %v29, 1.6732632
    %v32 = vmul.f32 %v30, 1.6732632
    %vm33 = vcmp.gt.f32.partialorder %v21, 0.0
    %vm34 = vcmp.gt.f32.partialorder %v22, 0.0
    %v35 = vsel %vm33, %v21, %v31
    %v36 = vsel %vm34, %v22, %v32
    %v37 = vmul.f32 %v35, 1.050701
    %v38 = vmul.f32 %v36, 1.050701
    %39 = vst [vmem:[#allocation5] sm:$0xff] %v37
    %40 = vst [vmem:[#allocation5 + $0x8] sm:$0xff] %v38
    // Predicated region
    $region10: #{tpu_custom_call.1} parent=1 // pred_check
      _
    $region11: #{tpu_custom_call.1} parent=1 // pred_check_branch
      %42 = sbr.rel (0) target = $region13
    $region12: #{tpu_custom_call.1} parent=1 // pred_region
      %s44 = ssub.s32 256, 256
      %45 = vsyncadd [#allocation4], %s44
      %s47 = sshll.u32 [#allocation5], 4
      %s48 = int_to_ptr.vmem [resolvable:$true] %s47
      %50 = dma.vmem_to_hbm [thread:$0]  %s48, 256, %s1, [#allocation4]
    $region13: #{tpu_custom_call.1} parent=1 // pred_fallthru
      _
    // Predicated region
    $region14: #{tpu_custom_call.1} parent=1 // pred_check
      _
    $region15: #{tpu_custom_call.1} parent=1 // pred_check_branch
      %52 = sbr.rel (0) target = $region17
    $region16: #{tpu_custom_call.1} parent=1 // pred_region
      %53 = dma.done [#allocation4], 256
    $region17: #{tpu_custom_call.1} parent=1 // pred_fallthru
      _
    %54 = vsyncpa [#allocation3], 1
    %55 = vsyncpa [#allocation4], 1

</llo_original>
